<compile_context>
chip_gen: v7x
topology: tpu7x:2x2x1
jax: 0.10.0
libtpu: 0.0.40
codegen_flags: <defaults>
</compile_context>

<pallas_src>
import functools

import jax
import jax.numpy as jnp
from jax import lax
from jax.experimental import pallas as pl
from jax.experimental.pallas import tpu as pltpu


def _round_up(x, m):
    return (x + m - 1) // m * m


# ------------------------------- Pallas kernel -------------------------------

def _wsconv2d_kernel(x_ref, w_ref, b_ref, o_ref, xflat_ref, patch_ref, *,
                     kh, kw, pad, cin_blk, h_out, wp):
    """One (image, c_out-tile) grid step.

    x_ref:     (C_in, H, W)         f32   unpadded input image (batch dim squeezed)
    w_ref:     (CT, K)              bf16  scale-folded, tap-major repacked weight
    b_ref:     (CT, 1)              f32   bias column
    o_ref:     (CT, H_out * Wp)     f32   flattened-spatial output (Wp = W + 2*pad)
    xflat_ref: (C_in, (Hp+1)*Wp)    f32   scratch: zero-padded, row-flattened image
    patch_ref: (K, H_out * Wp)      f32   scratch: im2col patch matrix
    """
    c_in, h_in, w_in = x_ref.shape
    m = h_out * wp

    # The im2col scratch depends only on the image, not on the c_out tile: rebuild it
    # only when the inner ("arbitrary") c_out-tile axis wraps around.
    @pl.when(pl.program_id(1) == 0)
    def _build_patches():
        # 1) zero-padded, row-flattened image in VMEM (replaces a wrapper-side jnp.pad
        #    that would write + re-read the whole activation through HBM).
        xflat_ref[...] = jnp.zeros_like(xflat_ref)
        for h in range(h_in):                               # static trip count
            off = (h + pad) * wp + pad
            xflat_ref[:, off:off + w_in] = x_ref[:, h, :]

        # 2) im2col: tap (i, j) reads the flat image shifted by i*Wp + j, so each patch
        #    row-block is a single contiguous lane-slice copy (no in-kernel reshape).
        if cin_blk != c_in:
            patch_ref[...] = jnp.zeros_like(patch_ref)      # keep padded channel rows clean
        for t in range(kh * kw):
            i, j = divmod(t, kw)
            d = i * wp + j
            patch_ref[t * cin_blk:t * cin_blk + c_in, :] = xflat_ref[:, d:d + m]

    # 3) single MXU contraction over K = kh*kw*cin_blk (bf16 in, f32 accumulate).
    #    The lane axis of acc / o_ref is flattened spatial -> lane-dense stores.
    acc = jnp.dot(w_ref[...], patch_ref[...].astype(w_ref.dtype),
                  preferred_element_type=jnp.float32)
    o_ref[...] = acc + b_ref[...]


# -------------------------------- wrappers -----------------------------------

def prepare_wsconv2d(weight, bias, *, gain=2):
    """One-time WSConv2d parameter prep (do NOT redo per call):
    fold the weight-scale into the weight, repack OIHW -> tap-major
    (C_out_pad, kh*kw*cin_blk) bf16, pad the bias to a (C_out_pad, 1) f32 column."""
    c_out, c_in, kh, kw = weight.shape
    scale = (gain / (c_in * kh * kw)) ** 0.5
    cin_blk = _round_up(c_in, 8)          # sublane-aligned tap blocks
    c_out_pad = _round_up(c_out, 8)

    w_t = jnp.transpose(weight.astype(jnp.float32) * scale, (0, 2, 3, 1))  # (O,kh,kw,C)
    w_t = jnp.pad(w_t, ((0, c_out_pad - c_out), (0, 0), (0, 0), (0, cin_blk - c_in)))
    w2 = w_t.reshape(c_out_pad, kh * kw * cin_blk).astype(jnp.bfloat16)
    b2 = jnp.pad(bias.astype(jnp.float32).reshape(-1, 1), ((0, c_out_pad - c_out), (0, 0)))
    return {"w2": w2, "b2": b2, "c_in": c_in, "c_out": c_out,
            "kh": kh, "kw": kw, "cin_blk": cin_blk}


def ws_conv2d(x, params, *, stride=1, padding=1):
    """WSConv2d forward.  x: (N, C_in, H, W) f32 -> (N, C_out, H_out, W_out) f32."""
    n, c_in, h_in, w_in = x.shape
    kh, kw, cin_blk = params["kh"], params["kw"], params["cin_blk"]
    c_out = params["c_out"]
    assert c_in == params["c_in"]

    hp, wp = h_in + 2 * padding, w_in + 2 * padding
    h_out1, w_out1 = hp - kh + 1, wp - kw + 1      # stride-1 output extent
    m = h_out1 * wp                                # flat row length incl. 2*pad junk cols
    k_tot = kh * kw * cin_blk
    c_out_pad = params["w2"].shape[0]

    divisors = [t for t in (256, 128, 64, 32, 16, 8) if c_out_pad % t == 0]
    # largest c_out tile that still leaves a handful of pipeline steps (helps v7x's 2 TCs)
    cout_tile = next((t for t in divisors if n * (c_out_pad // t) >= 8), divisors[-1])

    kernel = functools.partial(_wsconv2d_kernel, kh=kh, kw=kw, pad=padding,
                               cin_blk=cin_blk, h_out=h_out1, wp=wp)

    out_flat = pl.pallas_call(
        kernel,
        out_shape=jax.ShapeDtypeStruct((n, c_out_pad, m), jnp.float32),
        grid=(n, c_out_pad // cout_tile),
        in_specs=[
            pl.BlockSpec((None, c_in, h_in, w_in), lambda b, co: (b, 0, 0, 0)),
            pl.BlockSpec((cout_tile, k_tot), lambda b, co: (co, 0)),
            pl.BlockSpec((cout_tile, 1), lambda b, co: (co, 0)),
        ],
        out_specs=pl.BlockSpec((None, cout_tile, m), lambda b, co: (b, co, 0)),
        scratch_shapes=[
            pltpu.VMEM((c_in, (hp + 1) * wp), jnp.float32),   # padded, row-flattened image
            pltpu.VMEM((k_tot, m), jnp.float32),              # im2col patch matrix
        ],
        compiler_params=pltpu.CompilerParams(
            dimension_semantics=("parallel", "arbitrary"),
            vmem_limit_bytes=48 * 1024 * 1024,
        ),
    )(x.astype(jnp.float32), params["w2"], params["b2"])

    # Free reshape + cheap slice: split flat spatial, drop the 2*pad junk columns and
    # the zero-padded output channels.
    out = out_flat.reshape(n, c_out_pad, h_out1, wp)[:, :c_out, :, :w_out1]
    if stride > 1:
        # TODO(synk): stride > 1 (unused in ProGAN) is computed at stride 1 and subsampled.
        out = out[:, :, ::stride, ::stride]
    return out


# ----------------------------------- main -------------------------------------

if __name__ == "__main__":
    key = jax.random.PRNGKey(0)
    kx, kw_, kb = jax.random.split(key, 3)

    batch, c_in, c_out = 2, 4, 32
    ksize, stride, padding, gain = 3, 1, 1, 2
    H = W = 16

    x = jax.random.normal(kx, (batch, c_in, H, W), jnp.float32)
    # Module init is nn.init.normal_(weight) / zeros_(bias); a nonzero bias is used here
    # purely so the bias-add path is numerically exercised (forward is init-agnostic).
    weight = jax.random.normal(kw_, (c_out, c_in, ksize, ksize), jnp.float32)
    bias = 0.1 * jax.random.normal(kb, (c_out,), jnp.float32)

    params = prepare_wsconv2d(weight, bias, gain=gain)
    out = ws_conv2d(x, params, stride=stride, padding=padding)
    out = jax.block_until_ready(out)

    # Pure-JAX f32 reference:  conv2d(x * scale) + bias
    scale = (gain / (c_in * ksize * ksize)) ** 0.5
    ref = lax.conv_general_dilated(
        x * scale, weight, window_strides=(stride, stride),
        padding=[(padding, padding), (padding, padding)],
        dimension_numbers=("NCHW", "OIHW", "NCHW")) + bias.reshape(1, -1, 1, 1)

    assert out.shape == ref.shape == (batch, c_out, H, W), out.shape
    assert bool(jnp.all(jnp.isfinite(out)))
    assert bool(jnp.allclose(out, ref, rtol=5e-2, atol=5e-2)), (
        float(jnp.max(jnp.abs(out - ref))))
    print("KERNEL_OK")
</pallas_src>

<mosaic_0001>
module attributes {stable_mosaic.version = 11 : i64} {
  func.func @_wsconv2d_kernel(%arg0: i32, %arg1: i32, %arg2: memref<1x4x16x16xf32, #tpu.memory_space<vmem>>, %arg3: memref<8x72xbf16, #tpu.memory_space<vmem>>, %arg4: memref<8x1xf32, #tpu.memory_space<vmem>>, %arg5: memref<1x8x288xf32, #tpu.memory_space<vmem>>, %arg6: memref<4x342xf32, #tpu.memory_space<vmem>>, %arg7: memref<72x288xf32, #tpu.memory_space<vmem>>) attributes {dimension_semantics = [#tpu.dimension_semantics<parallel>, #tpu.dimension_semantics<arbitrary>], iteration_bounds = array<i64: 2, 4>, scalar_prefetch = 0 : i64, scratch_operands = 2 : i64, tpu.core_type = #tpu.core_type<tc>, window_params = [{transform_indices = @transform_0, window_bounds = array<i64: 1, 4, 16, 16>}, {transform_indices = @transform_1, window_bounds = array<i64: 8, 72>}, {transform_indices = @transform_2, window_bounds = array<i64: 8, 1>}, {transform_indices = @transform_3, window_bounds = array<i64: 1, 8, 288>}]} {
    %c0_i32 = arith.constant 0 : i32
    %0 = arith.cmpi eq, %arg1, %c0_i32 : i32
    %1 = arith.extui %0 : i1 to i32
    %c0_i32_0 = arith.constant 0 : i32
    %2 = arith.cmpi ne, %1, %c0_i32_0 : i32
    scf.if %2 {
      %cst_9 = arith.constant 0.000000e+00 : f32
      %13 = vector.broadcast %cst_9 : f32 to vector<4x342xf32>
      %c0_10 = arith.constant 0 : index
      %c0_11 = arith.constant 0 : index
      %14 = vector.load %arg6[%c0_10, %c0_11] : memref<4x342xf32, #tpu.memory_space<vmem>>, vector<4x342xf32>
      tpu.vector_store %arg6[%c0_10, %c0_11], %13 {strides = array<i32>} : memref<4x342xf32, #tpu.memory_space<vmem>>, vector<4x342xf32>,
      %c0_12 = arith.constant 0 : index
      %c0_13 = arith.constant 0 : index
      %c0_14 = arith.constant 0 : index
      %c0_15 = arith.constant 0 : index
      %15 = vector.load %arg2[%c0_12, %c0_13, %c0_14, %c0_15] : memref<1x4x16x16xf32, #tpu.memory_space<vmem>>, vector<1x4x1x16xf32>
      %16 = vector.shape_cast %15 : vector<1x4x1x16xf32> to vector<4x16xf32>
      %c0_16 = arith.constant 0 : index
      %c19 = arith.constant 19 : index
      %17 = vector.load %arg6[%c0_16, %c19] : memref<4x342xf32, #tpu.memory_space<vmem>>, vector<4x16xf32>
      tpu.vector_store %arg6[%c0_16, %c19], %16 {strides = array<i32>} : memref<4x342xf32, #tpu.memory_space<vmem>>, vector<4x16xf32>,
      %c0_17 = arith.constant 0 : index
      %c0_18 = arith.constant 0 : index
      %c1 = arith.constant 1 : index
      %c0_19 = arith.constant 0 : index
      %18 = vector.load %arg2[%c0_17, %c0_18, %c1, %c0_19] : memref<1x4x16x16xf32, #tpu.memory_space<vmem>>, vector<1x4x1x16xf32>
      %19 = vector.shape_cast %18 : vector<1x4x1x16xf32> to vector<4x16xf32>
      %c0_20 = arith.constant 0 : index
      %c37 = arith.constant 37 : index
      %20 = vector.load %arg6[%c0_20, %c37] : memref<4x342xf32, #tpu.memory_space<vmem>>, vector<4x16xf32>
      tpu.vector_store %arg6[%c0_20, %c37], %19 {strides = array<i32>} : memref<4x342xf32, #tpu.memory_space<vmem>>, vector<4x16xf32>,
      %c0_21 = arith.constant 0 : index
      %c0_22 = arith.constant 0 : index
      %c2 = arith.constant 2 : index
      %c0_23 = arith.constant 0 : index
      %21 = vector.load %arg2[%c0_21, %c0_22, %c2, %c0_23] : memref<1x4x16x16xf32, #tpu.memory_space<vmem>>, vector<1x4x1x16xf32>
      %22 = vector.shape_cast %21 : vector<1x4x1x16xf32> to vector<4x16xf32>
      %c0_24 = arith.constant 0 : index
      %c55 = arith.constant 55 : index
      %23 = vector.load %arg6[%c0_24, %c55] : memref<4x342xf32, #tpu.memory_space<vmem>>, vector<4x16xf32>
      tpu.vector_store %arg6[%c0_24, %c55], %22 {strides = array<i32>} : memref<4x342xf32, #tpu.memory_space<vmem>>, vector<4x16xf32>,
      %c0_25 = arith.constant 0 : index
      %c0_26 = arith.constant 0 : index
      %c3 = arith.constant 3 : index
      %c0_27 = arith.constant 0 : index
      %24 = vector.load %arg2[%c0_25, %c0_26, %c3, %c0_27] : memref<1x4x16x16xf32, #tpu.memory_space<vmem>>, vector<1x4x1x16xf32>
      %25 = vector.shape_cast %24 : vector<1x4x1x16xf32> to vector<4x16xf32>
      %c0_28 = arith.constant 0 : index
      %c73 = arith.constant 73 : index
      %26 = vector.load %arg6[%c0_28, %c73] : memref<4x342xf32, #tpu.memory_space<vmem>>, vector<4x16xf32>
      tpu.vector_store %arg6[%c0_28, %c73], %25 {strides = array<i32>} : memref<4x342xf32, #tpu.memory_space<vmem>>, vector<4x16xf32>,
      %c0_29 = arith.constant 0 : index
      %c0_30 = arith.constant 0 : index
      %c4 = arith.constant 4 : index
      %c0_31 = arith.constant 0 : index
      %27 = vector.load %arg2[%c0_29, %c0_30, %c4, %c0_31] : memref<1x4x16x16xf32, #tpu.memory_space<vmem>>, vector<1x4x1x16xf32>
      %28 = vector.shape_cast %27 : vector<1x4x1x16xf32> to vector<4x16xf32>
      %c0_32 = arith.constant 0 : index
      %c91 = arith.constant 91 : index
      %29 = vector.load %arg6[%c0_32, %c91] : memref<4x342xf32, #tpu.memory_space<vmem>>, vector<4x16xf32>
      tpu.vector_store %arg6[%c0_32, %c91], %28 {strides = array<i32>} : memref<4x342xf32, #tpu.memory_space<vmem>>, vector<4x16xf32>,
      %c0_33 = arith.constant 0 : index
      %c0_34 = arith.constant 0 : index
      %c5 = arith.constant 5 : index
      %c0_35 = arith.constant 0 : index
      %30 = vector.load %arg2[%c0_33, %c0_34, %c5, %c0_35] : memref<1x4x16x16xf32, #tpu.memory_space<vmem>>, vector<1x4x1x16xf32>
      %31 = vector.shape_cast %30 : vector<1x4x1x16xf32> to vector<4x16xf32>
      %c0_36 = arith.constant 0 : index
      %c109 = arith.constant 109 : index
      %32 = vector.load %arg6[%c0_36, %c109] : memref<4x342xf32, #tpu.memory_space<vmem>>, vector<4x16xf32>
      tpu.vector_store %arg6[%c0_36, %c109], %31 {strides = array<i32>} : memref<4x342xf32, #tpu.memory_space<vmem>>, vector<4x16xf32>,
      %c0_37 = arith.constant 0 : index
      %c0_38 = arith.constant 0 : index
      %c6 = arith.constant 6 : index
      %c0_39 = arith.constant 0 : index
      %33 = vector.load %arg2[%c0_37, %c0_38, %c6, %c0_39] : memref<1x4x16x16xf32, #tpu.memory_space<vmem>>, vector<1x4x1x16xf32>
      %34 = vector.shape_cast %33 : vector<1x4x1x16xf32> to vector<4x16xf32>
      %c0_40 = arith.constant 0 : index
      %c127 = arith.constant 127 : index
      %35 = vector.load %arg6[%c0_40, %c127] : memref<4x342xf32, #tpu.memory_space<vmem>>, vector<4x16xf32>
      tpu.vector_store %arg6[%c0_40, %c127], %34 {strides = array<i32>} : memref<4x342xf32, #tpu.memory_space<vmem>>, vector<4x16xf32>,
      %c0_41 = arith.constant 0 : index
      %c0_42 = arith.constant 0 : index
      %c7 = arith.constant 7 : index
      %c0_43 = arith.constant 0 : index
      %36 = vector.load %arg2[%c0_41, %c0_42, %c7, %c0_43] : memref<1x4x16x16xf32, #tpu.memory_space<vmem>>, vector<1x4x1x16xf32>
      %37 = vector.shape_cast %36 : vector<1x4x1x16xf32> to vector<4x16xf32>
      %c0_44 = arith.constant 0 : index
      %c145 = arith.constant 145 : index
      %38 = vector.load %arg6[%c0_44, %c145] : memref<4x342xf32, #tpu.memory_space<vmem>>, vector<4x16xf32>
      tpu.vector_store %arg6[%c0_44, %c145], %37 {strides = array<i32>} : memref<4x342xf32, #tpu.memory_space<vmem>>, vector<4x16xf32>,
      %c0_45 = arith.constant 0 : index
      %c0_46 = arith.constant 0 : index
      %c8 = arith.constant 8 : index
      %c0_47 = arith.constant 0 : index
      %39 = vector.load %arg2[%c0_45, %c0_46, %c8, %c0_47] : memref<1x4x16x16xf32, #tpu.memory_space<vmem>>, vector<1x4x1x16xf32>
      %40 = vector.shape_cast %39 : vector<1x4x1x16xf32> to vector<4x16xf32>
      %c0_48 = arith.constant 0 : index
      %c163 = arith.constant 163 : index
      %41 = vector.load %arg6[%c0_48, %c163] : memref<4x342xf32, #tpu.memory_space<vmem>>, vector<4x16xf32>
      tpu.vector_store %arg6[%c0_48, %c163], %40 {strides = array<i32>} : memref<4x342xf32, #tpu.memory_space<vmem>>, vector<4x16xf32>,
      %c0_49 = arith.constant 0 : index
      %c0_50 = arith.constant 0 : index
      %c9 = arith.constant 9 : index
      %c0_51 = arith.constant 0 : index
      %42 = vector.load %arg2[%c0_49, %c0_50, %c9, %c0_51] : memref<1x4x16x16xf32, #tpu.memory_space<vmem>>, vector<1x4x1x16xf32>
      %43 = vector.shape_cast %42 : vector<1x4x1x16xf32> to vector<4x16xf32>
      %c0_52 = arith.constant 0 : index
      %c181 = arith.constant 181 : index
      %44 = vector.load %arg6[%c0_52, %c181] : memref<4x342xf32, #tpu.memory_space<vmem>>, vector<4x16xf32>
      tpu.vector_store %arg6[%c0_52, %c181], %43 {strides = array<i32>} : memref<4x342xf32, #tpu.memory_space<vmem>>, vector<4x16xf32>,
      %c0_53 = arith.constant 0 : index
      %c0_54 = arith.constant 0 : index
      %c10 = arith.constant 10 : index
      %c0_55 = arith.constant 0 : index
      %45 = vector.load %arg2[%c0_53, %c0_54, %c10, %c0_55] : memref<1x4x16x16xf32, #tpu.memory_space<vmem>>, vector<1x4x1x16xf32>
      %46 = vector.shape_cast %45 : vector<1x4x1x16xf32> to vector<4x16xf32>
      %c0_56 = arith.constant 0 : index
      %c199 = arith.constant 199 : index
      %47 = vector.load %arg6[%c0_56, %c199] : memref<4x342xf32, #tpu.memory_space<vmem>>, vector<4x16xf32>
      tpu.vector_store %arg6[%c0_56, %c199], %46 {strides = array<i32>} : memref<4x342xf32, #tpu.memory_space<vmem>>, vector<4x16xf32>,
      %c0_57 = arith.constant 0 : index
      %c0_58 = arith.constant 0 : index
      %c11 = arith.constant 11 : index
      %c0_59 = arith.constant 0 : index
      %48 = vector.load %arg2[%c0_57, %c0_58, %c11, %c0_59] : memref<1x4x16x16xf32, #tpu.memory_space<vmem>>, vector<1x4x1x16xf32>
      %49 = vector.shape_cast %48 : vector<1x4x1x16xf32> to vector<4x16xf32>
      %c0_60 = arith.constant 0 : index
      %c217 = arith.constant 217 : index
      %50 = vector.load %arg6[%c0_60, %c217] : memref<4x342xf32, #tpu.memory_space<vmem>>, vector<4x16xf32>
      tpu.vector_store %arg6[%c0_60, %c217], %49 {strides = array<i32>} : memref<4x342xf32, #tpu.memory_space<vmem>>, vector<4x16xf32>,
      %c0_61 = arith.constant 0 : index
      %c0_62 = arith.constant 0 : index
      %c12 = arith.constant 12 : index
      %c0_63 = arith.constant 0 : index
      %51 = vector.load %arg2[%c0_61, %c0_62, %c12, %c0_63] : memref<1x4x16x16xf32, #tpu.memory_space<vmem>>, vector<1x4x1x16xf32>
      %52 = vector.shape_cast %51 : vector<1x4x1x16xf32> to vector<4x16xf32>
      %c0_64 = arith.constant 0 : index
      %c235 = arith.constant 235 : index
      %53 = vector.load %arg6[%c0_64, %c235] : memref<4x342xf32, #tpu.memory_space<vmem>>, vector<4x16xf32>
      tpu.vector_store %arg6[%c0_64, %c235], %52 {strides = array<i32>} : memref<4x342xf32, #tpu.memory_space<vmem>>, vector<4x16xf32>,
      %c0_65 = arith.constant 0 : index
      %c0_66 = arith.constant 0 : index
      %c13 = arith.constant 13 : index
      %c0_67 = arith.constant 0 : index
      %54 = vector.load %arg2[%c0_65, %c0_66, %c13, %c0_67] : memref<1x4x16x16xf32, #tpu.memory_space<vmem>>, vector<1x4x1x16xf32>
      %55 = vector.shape_cast %54 : vector<1x4x1x16xf32> to vector<4x16xf32>
      %c0_68 = arith.constant 0 : index
      %c253 = arith.constant 253 : index
      %56 = vector.load %arg6[%c0_68, %c253] : memref<4x342xf32, #tpu.memory_space<vmem>>, vector<4x16xf32>
      tpu.vector_store %arg6[%c0_68, %c253], %55 {strides = array<i32>} : memref<4x342xf32, #tpu.memory_space<vmem>>, vector<4x16xf32>,
      %c0_69 = arith.constant 0 : index
      %c0_70 = arith.constant 0 : index
      %c14 = arith.constant 14 : index
      %c0_71 = arith.constant 0 : index
      %57 = vector.load %arg2[%c0_69, %c0_70, %c14, %c0_71] : memref<1x4x16x16xf32, #tpu.memory_space<vmem>>, vector<1x4x1x16xf32>
      %58 = vector.shape_cast %57 : vector<1x4x1x16xf32> to vector<4x16xf32>
      %c0_72 = arith.constant 0 : index
      %c271 = arith.constant 271 : index
      %59 = vector.load %arg6[%c0_72, %c271] : memref<4x342xf32, #tpu.memory_space<vmem>>, vector<4x16xf32>
      tpu.vector_store %arg6[%c0_72, %c271], %58 {strides = array<i32>} : memref<4x342xf32, #tpu.memory_space<vmem>>, vector<4x16xf32>,
      %c0_73 = arith.constant 0 : index
      %c0_74 = arith.constant 0 : index
      %c15 = arith.constant 15 : index
      %c0_75 = arith.constant 0 : index
      %60 = vector.load %arg2[%c0_73, %c0_74, %c15, %c0_75] : memref<1x4x16x16xf32, #tpu.memory_space<vmem>>, vector<1x4x1x16xf32>
      %61 = vector.shape_cast %60 : vector<1x4x1x16xf32> to vector<4x16xf32>
      %c0_76 = arith.constant 0 : index
      %c289 = arith.constant 289 : index
      %62 = vector.load %arg6[%c0_76, %c289] : memref<4x342xf32, #tpu.memory_space<vmem>>, vector<4x16xf32>
      tpu.vector_store %arg6[%c0_76, %c289], %61 {strides = array<i32>} : memref<4x342xf32, #tpu.memory_space<vmem>>, vector<4x16xf32>,
      %cst_77 = arith.constant 0.000000e+00 : f32
      %63 = vector.broadcast %cst_77 : f32 to vector<72x288xf32>
      %c0_78 = arith.constant 0 : index
      %c0_79 = arith.constant 0 : index
      %64 = vector.load %arg7[%c0_78, %c0_79] : memref<72x288xf32, #tpu.memory_space<vmem>>, vector<72x288xf32>
      tpu.vector_store %arg7[%c0_78, %c0_79], %63 {strides = array<i32>} : memref<72x288xf32, #tpu.memory_space<vmem>>, vector<72x288xf32>,
      %c0_80 = arith.constant 0 : index
      %c0_81 = arith.constant 0 : index
      %65 = vector.load %arg6[%c0_80, %c0_81] : memref<4x342xf32, #tpu.memory_space<vmem>>, vector<4x288xf32>
      %c0_82 = arith.constant 0 : index
      %c0_83 = arith.constant 0 : index
      %66 = vector.load %arg7[%c0_82, %c0_83] : memref<72x288xf32, #tpu.memory_space<vmem>>, vector<4x288xf32>
      tpu.vector_store %arg7[%c0_82, %c0_83], %65 {strides = array<i32>} : memref<72x288xf32, #tpu.memory_space<vmem>>, vector<4x288xf32>,
      %c0_84 = arith.constant 0 : index
      %c1_85 = arith.constant 1 : index
      %67 = vector.load %arg6[%c0_84, %c1_85] : memref<4x342xf32, #tpu.memory_space<vmem>>, vector<4x288xf32>
      %c8_86 = arith.constant 8 : index
      %c0_87 = arith.constant 0 : index
      %68 = vector.load %arg7[%c8_86, %c0_87] : memref<72x288xf32, #tpu.memory_space<vmem>>, vector<4x288xf32>
      tpu.vector_store %arg7[%c8_86, %c0_87], %67 {strides = array<i32>} : memref<72x288xf32, #tpu.memory_space<vmem>>, vector<4x288xf32>,
      %c0_88 = arith.constant 0 : index
      %c2_89 = arith.constant 2 : index
      %69 = vector.load %arg6[%c0_88, %c2_89] : memref<4x342xf32, #tpu.memory_space<vmem>>, vector<4x288xf32>
      %c16 = arith.constant 16 : index
      %c0_90 = arith.constant 0 : index
      %70 = vector.load %arg7[%c16, %c0_90] : memref<72x288xf32, #tpu.memory_space<vmem>>, vector<4x288xf32>
      tpu.vector_store %arg7[%c16, %c0_90], %69 {strides = array<i32>} : memref<72x288xf32, #tpu.memory_space<vmem>>, vector<4x288xf32>,
      %c0_91 = arith.constant 0 : index
      %c18 = arith.constant 18 : index
      %71 = vector.load %arg6[%c0_91, %c18] : memref<4x342xf32, #tpu.memory_space<vmem>>, vector<4x288xf32>
      %c24 = arith.constant 24 : index
      %c0_92 = arith.constant 0 : index
      %72 = vector.load %arg7[%c24, %c0_92] : memref<72x288xf32, #tpu.memory_space<vmem>>, vector<4x288xf32>
      tpu.vector_store %arg7[%c24, %c0_92], %71 {strides = array<i32>} : memref<72x288xf32, #tpu.memory_space<vmem>>, vector<4x288xf32>,
      %c0_93 = arith.constant 0 : index
      %c19_94 = arith.constant 19 : index
      %73 = vector.load %arg6[%c0_93, %c19_94] : memref<4x342xf32, #tpu.memory_space<vmem>>, vector<4x288xf32>
      %c32 = arith.constant 32 : index
      %c0_95 = arith.constant 0 : index
      %74 = vector.load %arg7[%c32, %c0_95] : memref<72x288xf32, #tpu.memory_space<vmem>>, vector<4x288xf32>
      tpu.vector_store %arg7[%c32, %c0_95], %73 {strides = array<i32>} : memref<72x288xf32, #tpu.memory_space<vmem>>, vector<4x288xf32>,
      %c0_96 = arith.constant 0 : index
      %c20 = arith.constant 20 : index
      %75 = vector.load %arg6[%c0_96, %c20] : memref<4x342xf32, #tpu.memory_space<vmem>>, vector<4x288xf32>
      %c40 = arith.constant 40 : index
      %c0_97 = arith.constant 0 : index
      %76 = vector.load %arg7[%c40, %c0_97] : memref<72x288xf32, #tpu.memory_space<vmem>>, vector<4x288xf32>
      tpu.vector_store %arg7[%c40, %c0_97], %75 {strides = array<i32>} : memref<72x288xf32, #tpu.memory_space<vmem>>, vector<4x288xf32>,
      %c0_98 = arith.constant 0 : index
      %c36 = arith.constant 36 : index
      %77 = vector.load %arg6[%c0_98, %c36] : memref<4x342xf32, #tpu.memory_space<vmem>>, vector<4x288xf32>
      %c48 = arith.constant 48 : index
      %c0_99 = arith.constant 0 : index
      %78 = vector.load %arg7[%c48, %c0_99] : memref<72x288xf32, #tpu.memory_space<vmem>>, vector<4x288xf32>
      tpu.vector_store %arg7[%c48, %c0_99], %77 {strides = array<i32>} : memref<72x288xf32, #tpu.memory_space<vmem>>, vector<4x288xf32>,
      %c0_100 = arith.constant 0 : index
      %c37_101 = arith.constant 37 : index
      %79 = vector.load %arg6[%c0_100, %c37_101] : memref<4x342xf32, #tpu.memory_space<vmem>>, vector<4x288xf32>
      %c56 = arith.constant 56 : index
      %c0_102 = arith.constant 0 : index
      %80 = vector.load %arg7[%c56, %c0_102] : memref<72x288xf32, #tpu.memory_space<vmem>>, vector<4x288xf32>
      tpu.vector_store %arg7[%c56, %c0_102], %79 {strides = array<i32>} : memref<72x288xf32, #tpu.memory_space<vmem>>, vector<4x288xf32>,
      %c0_103 = arith.constant 0 : index
      %c38 = arith.constant 38 : index
      %81 = vector.load %arg6[%c0_103, %c38] : memref<4x342xf32, #tpu.memory_space<vmem>>, vector<4x288xf32>
      %c64 = arith.constant 64 : index
      %c0_104 = arith.constant 0 : index
      %82 = vector.load %arg7[%c64, %c0_104] : memref<72x288xf32, #tpu.memory_space<vmem>>, vector<4x288xf32>
      tpu.vector_store %arg7[%c64, %c0_104], %81 {strides = array<i32>} : memref<72x288xf32, #tpu.memory_space<vmem>>, vector<4x288xf32>,
    } else {
    }
    %c0 = arith.constant 0 : index
    %c0_1 = arith.constant 0 : index
    %3 = vector.load %arg3[%c0, %c0_1] : memref<8x72xbf16, #tpu.memory_space<vmem>>, vector<8x72xbf16>
    %c0_2 = arith.constant 0 : index
    %c0_3 = arith.constant 0 : index
    %4 = vector.load %arg7[%c0_2, %c0_3] : memref<72x288xf32, #tpu.memory_space<vmem>>, vector<72x288xf32>
    %5 = arith.truncf %4 : vector<72x288xf32> to vector<72x288xbf16>
    %cst = arith.constant dense<0.000000e+00> : vector<8x288xf32>
    %6 = tpu.matmul %3, %5, %cst {dimension_numbers = #tpu.dot_dimension_numbers<[1], [0], [0], [1], [0, 0, 1, 1], [], []>} : vector<8x72xbf16>, vector<72x288xbf16>, vector<8x288xf32> -> vector<8x288xf32>
    %c0_4 = arith.constant 0 : index
    %c0_5 = arith.constant 0 : index
    %7 = vector.load %arg4[%c0_4, %c0_5] : memref<8x1xf32, #tpu.memory_space<vmem>>, vector<8x1xf32>
    %8 = vector.broadcast %7 : vector<8x1xf32> to vector<8x288xf32>
    %9 = arith.addf %6, %8 : vector<8x288xf32>
    %c0_6 = arith.constant 0 : index
    %c0_7 = arith.constant 0 : index
    %c0_8 = arith.constant 0 : index
    %10 = vector.load %arg5[%c0_6, %c0_7, %c0_8] : memref<1x8x288xf32, #tpu.memory_space<vmem>>, vector<1x8x288xf32>
    %11 = vector.shape_cast %10 : vector<1x8x288xf32> to vector<8x288xf32>
    %12 = vector.shape_cast %9 : vector<8x288xf32> to vector<1x8x288xf32>
    tpu.vector_store %arg5[%c0_6, %c0_7, %c0_8], %12 {strides = array<i32>} : memref<1x8x288xf32, #tpu.memory_space<vmem>>, vector<1x8x288xf32>,
    return
  }
  func.func @transform_0(%arg0: i32, %arg1: i32) -> (i32, i32, i32, i32) {
    %c0_i32 = arith.constant 0 : i32
    %c0_i32_0 = arith.constant 0 : i32
    %c0_i32_1 = arith.constant 0 : i32
    %c0_i32_2 = arith.constant 0 : i32
    return %arg0, %c0_i32, %c0_i32_0, %c0_i32_1 : i32, i32, i32, i32
  }
  func.func @transform_1(%arg0: i32, %arg1: i32) -> (i32, i32) {
    %c0_i32 = arith.constant 0 : i32
    %c0_i32_0 = arith.constant 0 : i32
    return %arg1, %c0_i32 : i32, i32
  }
  func.func @transform_2(%arg0: i32, %arg1: i32) -> (i32, i32) {
    %c0_i32 = arith.constant 0 : i32
    %c0_i32_0 = arith.constant 0 : i32
    return %arg1, %c0_i32 : i32, i32
  }
  func.func @transform_3(%arg0: i32, %arg1: i32) -> (i32, i32, i32) {
    %c0_i32 = arith.constant 0 : i32
    %c0_i32_0 = arith.constant 0 : i32
    return %arg0, %arg1, %c0_i32 : i32, i32, i32
  }
}

</mosaic_0001>

<llo_original>
// kernel: tpu_custom_call.1
$region0: #{tpu_custom_call.1}
  #allocation0 [shape = 'u32[]', space=smem, size = 0x4, offset = 0x4, fixed_abs, tag = 'smem constant byte address 0x4 - core index']
  #allocation1 [shape = 'u32[144,128]{1,0:T(1,128)}', space=vmem, size = 0x12000, scoped, tag = 'internal scratch']
  #allocation2 [shape = 'f32[4,342]{1,0:T(4,128)}', space=vmem, size = 0x1800, scoped, tag = 'scratch operand']
  #allocation3 [shape = 'f32[72,288]{1,0:T(8,128)}', space=vmem, size = 0x1b000, scoped, tag = 'scratch operand']
  %s0 = inlined_call_operand.hbm [shape: f32[2,4,16,16], index: 0, kind: input, shape index: {}]
  %s1 = inlined_call_operand.vmem [shape: bf16[32,72], index: 1, kind: input, shape index: {}]
  %s2 = inlined_call_operand.vmem [shape: f32[32,1], index: 2, kind: input, shape index: {}]
  %s3 = inlined_call_operand.hbm [shape: f32[2,32,288], index: 3, kind: output, shape index: {}]
  %s4 = sld [smem:[#allocation0]]
  $region53: #{tpu_custom_call.1} parent=0
    _
  %s6 = ssub.s32 1, %s4
  %s7 = scalar_select 0, %s6, %s4
  $region1: #{tpu_custom_call.1} parent=0
    #allocation4 [shape = 'u8[65536]{0}', space=vmem, size = 0x10000, scoped, tag = 'input window, operand 0']
    #allocation5 [shape = 's32[2]{0}', space=sflag, size = 0x8, scoped, tag = 'scoped memory for tpu_custom_call.1']
    #allocation6 [shape = 's32[2]{0}', space=sflag, size = 0x8, scoped, tag = 'scoped memory for tpu_custom_call.1']
    #allocation7 [shape = 'u8[24576]{0}', space=vmem, size = 0x6000, scoped, tag = 'output window, operand 0']
    %8 = vsyncpa [#allocation5], 0
    %s9 = scalar_lea.sflag [#allocation5], 1
    %10 = vsyncpa %s9, 0
    %11 = vsyncpa [#allocation6], 0
    %s12 = scalar_lea.sflag [#allocation6], 1
    %13 = vsyncpa %s12, 0
    loop: start=0, step=1, limit=10
    $region2: #{tpu_custom_call.1} parent=1 // loop_pre_header
      _
    $region3: #{tpu_custom_call.1} parent=1 // loop_header
      %s15 = sphi 0, %s19
      %p16 = scmp.ge.s32.totalorder %s15, 10
      %s22 = sphi 0, %s34
      %s23 = sphi 0, %s30
      %s24 = sphi 0, %s22
      %s25 = sphi 0, %s23
      %s26 = sphi 0, %s24
      %s27 = sphi 0, %s25
      %s37 = sphi 0, %s39
      %s40 = sphi 0, %s37
      %s41 = sphi 0, %s40
      %s57 = sphi 0, %s41
      %s63 = sphi 0, %s65
      %s66 = sphi 0, %s63
      %s67 = sphi 0, %s66
      %s83 = sphi 0, %s67
      %s89 = sphi 0, %s91
      %s92 = sphi 0, %s89
      %s93 = sphi 0, %s92
      %s109 = sphi 0, %s93
      %s117 = sphi 0, %s119
      %s120 = sphi 0, %s117
      %s121 = sphi 0, %s120
      %s137 = sphi 0, %s121
    $region4: #{tpu_custom_call.1} parent=1 // loop_header_branch
      %18 = sbr.rel (%p16) target = $region8
    $region5: #{tpu_custom_call.1} parent=1 // loop_body
      %s20 = ssub.s32 %s15, 1
      %s21 = ssub.s32 %s15, 2
      %s28 = sadd.s32 1, %s23
      %p29 = scmp.ge.s32.totalorder %s28, 4
      %s30 = scalar_select %p29, 0, %s28
      %s31 = sadd.s32 1, %s22
      %s32 = scalar_select %p29, %s31, %s22
      %p33 = scmp.ge.s32.totalorder %s32, 2
      %s34 = scalar_select %p33, 0, %s32
      %s35 = ssub.s32 %s22, %s34
      %p36 = scmp.eq.s32.totalorder %s35, 0
      %s38 = sadd.s32 %s37, 1
      %s39 = scalar_select %p36, %s37, %s38
      %p42 = pneg %p36
      %p43 = scmp.eq.s32.totalorder %s15, 7
      %p44 = por %p42, %p43
      %p45 = scmp.ne.s32.totalorder %s37, %s40
      %p46 = scmp.eq.s32.totalorder %s15, 0
      %p47 = por %p45, %p46
      %p48 = scmp.ne.s32.totalorder %s37, %s40
      %p49 = scmp.eq.s32.totalorder %s20, 7
      %p50 = por %p48, %p49
      %p51 = scmp.ne.s32.totalorder %s40, %s41
      %p52 = scmp.eq.s32.totalorder %s20, 0
      %p53 = por %p51, %p52
      %p54 = scmp.ne.s32.totalorder %s40, %s41
      %p55 = scmp.eq.s32.totalorder %s21, 7
      %p56 = por %p54, %p55
      %p58 = scmp.ne.s32.totalorder %s41, %s57
      %p59 = scmp.eq.s32.totalorder %s21, 0
      %p60 = por %p58, %p59
      %s61 = ssub.s32 %s23, %s30
      %p62 = scmp.eq.s32.totalorder %s61, 0
      %s64 = sadd.s32 %s63, 1
      %s65 = scalar_select %p62, %s63, %s64
      %p68 = pneg %p62
      %p69 = scmp.eq.s32.totalorder %s15, 7
      %p70 = por %p68, %p69
      %p71 = scmp.ne.s32.totalorder %s63, %s66
      %p72 = scmp.eq.s32.totalorder %s15, 0
      %p73 = por %p71, %p72
      %p74 = scmp.ne.s32.totalorder %s63, %s66
      %p75 = scmp.eq.s32.totalorder %s20, 7
      %p76 = por %p74, %p75
      %p77 = scmp.ne.s32.totalorder %s66, %s67
      %p78 = scmp.eq.s32.totalorder %s20, 0
      %p79 = por %p77, %p78
      %p80 = scmp.ne.s32.totalorder %s66, %s67
      %p81 = scmp.eq.s32.totalorder %s21, 7
      %p82 = por %p80, %p81
      %p84 = scmp.ne.s32.totalorder %s67, %s83
      %p85 = scmp.eq.s32.totalorder %s21, 0
      %p86 = por %p84, %p85
      %s87 = ssub.s32 %s23, %s30
      %p88 = scmp.eq.s32.totalorder %s87, 0
      %s90 = sadd.s32 %s89, 1
      %s91 = scalar_select %p88, %s89, %s90
      %p94 = pneg %p88
      %p95 = scmp.eq.s32.totalorder %s15, 7
      %p96 = por %p94, %p95
      %p97 = scmp.ne.s32.totalorder %s89, %s92
      %p98 = scmp.eq.s32.totalorder %s15, 0
      %p99 = por %p97, %p98
      %p100 = scmp.ne.s32.totalorder %s89, %s92
      %p101 = scmp.eq.s32.totalorder %s20, 7
      %p102 = por %p100, %p101
      %p103 = scmp.ne.s32.totalorder %s92, %s93
      %p104 = scmp.eq.s32.totalorder %s20, 0
      %p105 = por %p103, %p104
      %p106 = scmp.ne.s32.totalorder %s92, %s93
      %p107 = scmp.eq.s32.totalorder %s21, 7
      %p108 = por %p106, %p107
      %p110 = scmp.ne.s32.totalorder %s93, %s109
      %p111 = scmp.eq.s32.totalorder %s21, 0
      %p112 = por %p110, %p111
      %s113 = ssub.s32 %s22, %s34
      %s114 = ssub.s32 %s23, %s30
      %s115 = sor.u32 %s113, %s114
      %p116 = scmp.eq.s32.totalorder %s115, 0
      %s118 = sadd.s32 %s117, 1
      %s119 = scalar_select %p116, %s117, %s118
      %p122 = pneg %p116
      %p123 = scmp.eq.s32.totalorder %s15, 7
      %p124 = por %p122, %p123
      %p125 = scmp.ne.s32.totalorder %s117, %s120
      %p126 = scmp.eq.s32.totalorder %s15, 0
      %p127 = por %p125, %p126
      %p128 = scmp.ne.s32.totalorder %s117, %s120
      %p129 = scmp.eq.s32.totalorder %s20, 7
      %p130 = por %p128, %p129
      %p131 = scmp.ne.s32.totalorder %s120, %s121
      %p132 = scmp.eq.s32.totalorder %s20, 0
      %p133 = por %p131, %p132
      %p134 = scmp.ne.s32.totalorder %s120, %s121
      %p135 = scmp.eq.s32.totalorder %s21, 7
      %p136 = por %p134, %p135
      %p138 = scmp.ne.s32.totalorder %s121, %s137
      %p139 = scmp.eq.s32.totalorder %s21, 0
      %p140 = por %p138, %p139
      %p141 = scmp.le.s32.totalorder 1, %s15
      %p142 = scmp.lt.s32.totalorder %s15, 9
      %p143 = pnand %p141, %p142
      %p144 = pneg %p143
      // Predicated region
      $region9: #{tpu_custom_call.1} parent=5 // pred_check
        _
      $region10: #{tpu_custom_call.1} parent=5 // pred_check_branch
        %146 = sbr.rel (%p143) target = $region12
      $region11: #{tpu_custom_call.1} parent=5 // pred_region
        %s147 = ssub.s32 %s15, 1
      $region12: #{tpu_custom_call.1} parent=5 // pred_fallthru
        _
      %p148 = scmp.lt.s32.totalorder %s15, 8
      // Predicated region
      $region13: #{tpu_custom_call.1} parent=5 // pred_check
        %p149 = pneg %p148
      $region14: #{tpu_custom_call.1} parent=5 // pred_check_branch
        %151 = sbr.rel (%p149) target = $region16
      $region15: #{tpu_custom_call.1} parent=5 // pred_region
        // Predicated region
        $region17: #{tpu_custom_call.1} parent=15 // pred_check
          %p152 = pneg %p47
        $region18: #{tpu_custom_call.1} parent=15 // pred_check_branch
          %154 = sbr.rel (%p152) target = $region20
        $region19: #{tpu_custom_call.1} parent=15 // pred_region
          %s155 = sand.u32 %s37, 1
          %s156 = scalar_lea.sflag [#allocation5], %s155
          %s157 = sand.u32 %s37, 1
          %s158 = smul.addr %s157, 64
          %s159 = scalar_lea.vmem [#allocation4], %s158
          %s161 = ssub.s32 1024, 1024
          %162 = vsyncadd %s156, %s161
          %s163 = smul.addr %s22, 8
          %s164 = smul.addr %s163, 128
          %s165 = scalar_lea.hbm %s0, %s164
          %s166 = sshll.u32 %s159, 4
          %s167 = int_to_ptr.vmem [resolvable:$true] %s166
          %172 = dma.hbm_to_vmem [thread:$0]  %s165, 1024, %s167, %s156, 128, 128, 8
        $region20: #{tpu_custom_call.1} parent=15 // pred_fallthru
          _
        // Predicated region
        $region21: #{tpu_custom_call.1} parent=15 // pred_check
          %p173 = pneg %p73
        $region22: #{tpu_custom_call.1} parent=15 // pred_check_branch
          %175 = sbr.rel (%p173) target = $region24
        $region23: #{tpu_custom_call.1} parent=15 // pred_region
          %p176 = scmp.lt.s32.totalorder %s23, 3
          %s177 = scalar_select %p176, %s23, 3
          %s178 = smul.addr %s177, 4
          %s179 = scalar_lea.vmem %s1, %s178
        $region24: #{tpu_custom_call.1} parent=15 // pred_fallthru
          _
        // Predicated region
        $region25: #{tpu_custom_call.1} parent=15 // pred_check
          %p180 = pneg %p99
        $region26: #{tpu_custom_call.1} parent=15 // pred_check_branch
          %182 = sbr.rel (%p180) target = $region28
        $region27: #{tpu_custom_call.1} parent=15 // pred_region
          %p183 = scmp.lt.s32.totalorder %s23, 3
          %s184 = scalar_select %p183, %s23, 3
          %s185 = smul.addr %s184, 8
          %s186 = scalar_lea.vmem %s2, %s185
        $region28: #{tpu_custom_call.1} parent=15 // pred_fallthru
          _
      $region16: #{tpu_custom_call.1} parent=5 // pred_fallthru
        _
      %p187 = scmp.le.s32.totalorder 1, %s15
      %p188 = scmp.lt.s32.totalorder %s15, 9
      %p189 = pnand %p187, %p188
      %p190 = pneg %p189
      // Predicated region
      $region29: #{tpu_custom_call.1} parent=5 // pred_check
        _
      $region30: #{tpu_custom_call.1} parent=5 // pred_check_branch
        %192 = sbr.rel (%p189) target = $region32
      $region31: #{tpu_custom_call.1} parent=5 // pred_region
        %s193 = ssub.s32 %s15, 1
        %s194 = sand.u32 %s40, 1
        %s195 = scalar_lea.sflag [#allocation5], %s194
        %s196 = sand.u32 %s40, 1
        %s197 = smul.addr %s196, 64
        %s198 = scalar_lea.vmem [#allocation4], %s197
        // Predicated region
        $region33: #{tpu_custom_call.1} parent=31 // pred_check
          %p199 = pneg %p53
        $region34: #{tpu_custom_call.1} parent=31 // pred_check_branch
          %201 = sbr.rel (%p199) target = $region36
        $region35: #{tpu_custom_call.1} parent=31 // pred_region
          %202 = dma.done %s195, 1024
        $region36: #{tpu_custom_call.1} parent=31 // pred_fallthru
          _
        %s203 = sand.u32 %s40, 1
        %s204 = scalar_lea.sflag [#allocation5], %s203
        %s205 = sand.u32 %s40, 1
        %s206 = smul.addr %s205, 64
        %s207 = scalar_lea.vmem [#allocation4], %s206
        %p208 = pneg %p53
        %p209 = pneg %p50
        %p210 = scmp.lt.s32.totalorder %s25, 3
        %s211 = scalar_select %p210, %s25, 3
        %s212 = smul.addr %s211, 4
        %s213 = scalar_lea.vmem %s1, %s212
        %p214 = pneg %p79
        %p215 = pneg %p76
        %p216 = scmp.lt.s32.totalorder %s25, 3
        %s217 = scalar_select %p216, %s25, 3
        %s218 = smul.addr %s217, 8
        %s219 = scalar_lea.vmem %s2, %s218
        %p220 = pneg %p105
        %p221 = pneg %p102
        %p222 = pneg %p133
        %p223 = pneg %p130
        %s224 = sand.u32 %s120, 1
        %s225 = scalar_lea.sflag [#allocation6], %s224
        %s226 = sand.u32 %s120, 1
        %s227 = smul.addr %s226, 24
        %s228 = scalar_lea.vmem [#allocation7], %s227
        %p229 = scmp.lt.s32.totalorder %s25, 3
        %s230 = scalar_select %p229, %s25, 3
        %s231 = smul.addr %s230, 4
        %s232 = scalar_lea.vmem %s1, %s231
        %p233 = scmp.lt.s32.totalorder %s25, 3
        %s234 = scalar_select %p233, %s25, 3
        %s235 = smul.addr %s234, 8
        %s236 = scalar_lea.vmem %s2, %s235
        %p238 = scmp.eq.s32.totalorder %s25, 0
        // Predicated region
        $region37: #{tpu_custom_call.1} parent=31 // pred_check
          %p239 = pneg %p238
        $region38: #{tpu_custom_call.1} parent=31 // pred_check_branch
          %241 = sbr.rel (%p239) target = $region40
        $region39: #{tpu_custom_call.1} parent=31 // pred_region
          %242 = vst [vmem:[#allocation2] sm:$0xff] 0.0
          %vm243 = vcmask 699392
          %244 = vst.msk [vmem:[#allocation2 + $0x8] sm:$0xf] %vm243, 0.0
          %v245 = vld [vmem:[%s198] sm:$0x1]
          %v246 = vld [vmem:[%s198 + $0x10] sm:$0x1]
          %v247 = vld [vmem:[%s198 + $0x20] sm:$0x1]
          %v248 = vld [vmem:[%s198 + $0x30] sm:$0x1]
          %v253 = vrot.slane %v246, 7
          %vm254 = vcmask 1041409
          %v255 = vsel %vm254, %v253, %v245
          %vm256 = vcmask 1045509
          %v257 = vsel %vm256, %v253, %v255
          %v258 = vrot.slane %v247, 6
          %vm259 = vcmask 1042434
          %v260 = vsel %vm259, %v258, %v257
          %vm261 = vcmask 1046534
          %v262 = vsel %vm261, %v258, %v260
          %v263 = vrot.slane %v248, 5
          %vm264 = vcmask 1043459
          %v265 = vsel %vm264, %v263, %v262
          %vm266 = vcmask 1047559
          %v267 = vsel %vm266, %v263, %v265
          %268 = vrot.lane.b32.xlu0 %v267, 19
          %v269 = vpop.permute.xlu0 %268
          %vm271 = vcmask 281752
          %272 = vst.msk [vmem:[#allocation2] sm:$0xf] %vm271, %v269
          %v273 = vld [vmem:[%s198 + $0x1] sm:$0x1]
          %v274 = vld [vmem:[%s198 + $0x11] sm:$0x1]
          %v275 = vld [vmem:[%s198 + $0x21] sm:$0x1]
          %v276 = vld [vmem:[%s198 + $0x31] sm:$0x1]
          %v281 = vrot.slane %v274, 7
          %v282 = vsel %vm254, %v281, %v273
          %v283 = vsel %vm256, %v281, %v282
          %v284 = vrot.slane %v275, 6
          %v285 = vsel %vm259, %v284, %v283
          %v286 = vsel %vm261, %v284, %v285
          %v287 = vrot.slane %v276, 5
          %v288 = vsel %vm264, %v287, %v286
          %v289 = vsel %vm266, %v287, %v288
          %290 = vrot.lane.b32.xlu0 %v289, 37
          %v291 = vpop.permute.xlu0 %290
          %vm293 = vcmask 429352
          %294 = vst.msk [vmem:[#allocation2] sm:$0xf] %vm293, %v291
          %v295 = vld [vmem:[%s198 + $0x2] sm:$0x1]
          %v296 = vld [vmem:[%s198 + $0x12] sm:$0x1]
          %v297 = vld [vmem:[%s198 + $0x22] sm:$0x1]
          %v298 = vld [vmem:[%s198 + $0x32] sm:$0x1]
          %v303 = vrot.slane %v296, 7
          %v304 = vsel %vm254, %v303, %v295
          %v305 = vsel %vm256, %v303, %v304
          %v306 = vrot.slane %v297, 6
          %v307 = vsel %vm259, %v306, %v305
          %v308 = vsel %vm261, %v306, %v307
          %v309 = vrot.slane %v298, 5
          %v310 = vsel %vm264, %v309, %v308
          %v311 = vsel %vm266, %v309, %v310
          %312 = vrot.lane.b32.xlu0 %v311, 55
          %v313 = vpop.permute.xlu0 %312
          %vm315 = vcmask 576952
          %316 = vst.msk [vmem:[#allocation2] sm:$0xf] %vm315, %v313
          %v317 = vld [vmem:[%s198 + $0x3] sm:$0x1]
          %v318 = vld [vmem:[%s198 + $0x13] sm:$0x1]
          %v319 = vld [vmem:[%s198 + $0x23] sm:$0x1]
          %v320 = vld [vmem:[%s198 + $0x33] sm:$0x1]
          %v325 = vrot.slane %v318, 7
          %v326 = vsel %vm254, %v325, %v317
          %v327 = vsel %vm256, %v325, %v326
          %v328 = vrot.slane %v319, 6
          %v329 = vsel %vm259, %v328, %v327
          %v330 = vsel %vm261, %v328, %v329
          %v331 = vrot.slane %v320, 5
          %v332 = vsel %vm264, %v331, %v330
          %v333 = vsel %vm266, %v331, %v332
          %334 = vrot.lane.b32.xlu0 %v333, 73
          %v335 = vpop.permute.xlu0 %334
          %vm337 = vcmask 724552
          %338 = vst.msk [vmem:[#allocation2] sm:$0xf] %vm337, %v335
          %v339 = vld [vmem:[%s198 + $0x4] sm:$0x1]
          %v340 = vld [vmem:[%s198 + $0x14] sm:$0x1]
          %v341 = vld [vmem:[%s198 + $0x24] sm:$0x1]
          %v342 = vld [vmem:[%s198 + $0x34] sm:$0x1]
          %v347 = vrot.slane %v340, 7
          %v348 = vsel %vm254, %v347, %v339
          %v349 = vsel %vm256, %v347, %v348
          %v350 = vrot.slane %v341, 6
          %v351 = vsel %vm259, %v350, %v349
          %v352 = vsel %vm261, %v350, %v351
          %v353 = vrot.slane %v342, 5
          %v354 = vsel %vm264, %v353, %v352
          %v355 = vsel %vm266, %v353, %v354
          %356 = vrot.lane.b32.xlu0 %v355, 91
          %v357 = vpop.permute.xlu0 %356
          %vm359 = vcmask 872152
          %360 = vst.msk [vmem:[#allocation2] sm:$0xf] %vm359, %v357
          %v361 = vld [vmem:[%s198 + $0x5] sm:$0x1]
          %v362 = vld [vmem:[%s198 + $0x15] sm:$0x1]
          %v363 = vld [vmem:[%s198 + $0x25] sm:$0x1]
          %v364 = vld [vmem:[%s198 + $0x35] sm:$0x1]
          %v369 = vrot.slane %v362, 7
          %v370 = vsel %vm254, %v369, %v361
          %v371 = vsel %vm256, %v369, %v370
          %v372 = vrot.slane %v363, 6
          %v373 = vsel %vm259, %v372, %v371
          %v374 = vsel %vm261, %v372, %v373
          %v375 = vrot.slane %v364, 5
          %v376 = vsel %vm264, %v375, %v374
          %v377 = vsel %vm266, %v375, %v376
          %378 = vrot.lane.b32.xlu0 %v377, 109
          %v379 = vpop.permute.xlu0 %378
          %vm381 = vcmask 1019752
          %382 = vst.msk [vmem:[#allocation2] sm:$0xf] %vm381, %v379
          %v383 = vld [vmem:[%s198 + $0x6] sm:$0x1]
          %v384 = vld [vmem:[%s198 + $0x16] sm:$0x1]
          %v385 = vld [vmem:[%s198 + $0x26] sm:$0x1]
          %v386 = vld [vmem:[%s198 + $0x36] sm:$0x1]
          %v391 = vrot.slane %v384, 7
          %v392 = vsel %vm254, %v391, %v383
          %v393 = vsel %vm256, %v391, %v392
          %v394 = vrot.slane %v385, 6
          %v395 = vsel %vm259, %v394, %v393
          %v396 = vsel %vm261, %v394, %v395
          %v397 = vrot.slane %v386, 5
          %v398 = vsel %vm264, %v397, %v396
          %v399 = vsel %vm266, %v397, %v398
          %400 = vrot.lane.b32.xlu0 %v399, 127
          %v401 = vpop.permute.xlu0 %400
          %v402 = vrot.slane %v401, 4
          %vm403 = vcmask 1039360
          %v404 = vsel %vm403, %v402, %v401
          %vm406 = vcmask 1044472
          %vm407 = vcmask 121860
          %vm408 = vmor %vm407, %vm406
          %409 = vst.msk [vmem:[#allocation2] sm:$0xff] %vm408, %v404
          %v410 = vld [vmem:[%s198 + $0x7] sm:$0x1]
          %v411 = vld [vmem:[%s198 + $0x17] sm:$0x1]
          %v412 = vld [vmem:[%s198 + $0x27] sm:$0x1]
          %v413 = vld [vmem:[%s198 + $0x37] sm:$0x1]
          %v418 = vrot.slane %v411, 7
          %v419 = vsel %vm254, %v418, %v410
          %v420 = vsel %vm256, %v418, %v419
          %v421 = vrot.slane %v412, 6
          %v422 = vsel %vm259, %v421, %v420
          %v423 = vsel %vm261, %v421, %v422
          %v424 = vrot.slane %v413, 5
          %v425 = vsel %vm264, %v424, %v423
          %v426 = vsel %vm266, %v424, %v425
          %427 = vrot.lane.b32.xlu0 %v426, 17
          %v428 = vpop.permute.xlu0 %427
          %vm430 = vcmask 265352
          %431 = vst.msk [vmem:[#allocation2 + $0x4] sm:$0xf] %vm430, %v428
          %v432 = vld [vmem:[%s198 + $0x8] sm:$0x1]
          %v433 = vld [vmem:[%s198 + $0x18] sm:$0x1]
          %v434 = vld [vmem:[%s198 + $0x28] sm:$0x1]
          %v435 = vld [vmem:[%s198 + $0x38] sm:$0x1]
          %v440 = vrot.slane %v433, 7
          %v441 = vsel %vm254, %v440, %v432
          %v442 = vsel %vm256, %v440, %v441
          %v443 = vrot.slane %v434, 6
          %v444 = vsel %vm259, %v443, %v442
          %v445 = vsel %vm261, %v443, %v444
          %v446 = vrot.slane %v435, 5
          %v447 = vsel %vm264, %v446, %v445
          %v448 = vsel %vm266, %v446, %v447
          %449 = vrot.lane.b32.xlu0 %v448, 35
          %v450 = vpop.permute.xlu0 %449
          %vm452 = vcmask 412952
          %453 = vst.msk [vmem:[#allocation2 + $0x4] sm:$0xf] %vm452, %v450
          %v454 = vld [vmem:[%s198 + $0x9] sm:$0x1]
          %v455 = vld [vmem:[%s198 + $0x19] sm:$0x1]
          %v456 = vld [vmem:[%s198 + $0x29] sm:$0x1]
          %v457 = vld [vmem:[%s198 + $0x39] sm:$0x1]
          %v462 = vrot.slane %v455, 7
          %v463 = vsel %vm254, %v462, %v454
          %v464 = vsel %vm256, %v462, %v463
          %v465 = vrot.slane %v456, 6
          %v466 = vsel %vm259, %v465, %v464
          %v467 = vsel %vm261, %v465, %v466
          %v468 = vrot.slane %v457, 5
          %v469 = vsel %vm264, %v468, %v467
          %v470 = vsel %vm266, %v468, %v469
          %471 = vrot.lane.b32.xlu0 %v470, 53
          %v472 = vpop.permute.xlu0 %471
          %vm474 = vcmask 560552
          %475 = vst.msk [vmem:[#allocation2 + $0x4] sm:$0xf] %vm474, %v472
          %v476 = vld [vmem:[%s198 + $0xa] sm:$0x1]
          %v477 = vld [vmem:[%s198 + $0x1a] sm:$0x1]
          %v478 = vld [vmem:[%s198 + $0x2a] sm:$0x1]
          %v479 = vld [vmem:[%s198 + $0x3a] sm:$0x1]
          %v484 = vrot.slane %v477, 7
          %v485 = vsel %vm254, %v484, %v476
          %v486 = vsel %vm256, %v484, %v485
          %v487 = vrot.slane %v478, 6
          %v488 = vsel %vm259, %v487, %v486
          %v489 = vsel %vm261, %v487, %v488
          %v490 = vrot.slane %v479, 5
          %v491 = vsel %vm264, %v490, %v489
          %v492 = vsel %vm266, %v490, %v491
          %493 = vrot.lane.b32.xlu0 %v492, 71
          %v494 = vpop.permute.xlu0 %493
          %vm496 = vcmask 708152
          %497 = vst.msk [vmem:[#allocation2 + $0x4] sm:$0xf] %vm496, %v494
          %v498 = vld [vmem:[%s198 + $0xb] sm:$0x1]
          %v499 = vld [vmem:[%s198 + $0x1b] sm:$0x1]
          %v500 = vld [vmem:[%s198 + $0x2b] sm:$0x1]
          %v501 = vld [vmem:[%s198 + $0x3b] sm:$0x1]
          %v506 = vrot.slane %v499, 7
          %v507 = vsel %vm254, %v506, %v498
          %v508 = vsel %vm256, %v506, %v507
          %v509 = vrot.slane %v500, 6
          %v510 = vsel %vm259, %v509, %v508
          %v511 = vsel %vm261, %v509, %v510
          %v512 = vrot.slane %v501, 5
          %v513 = vsel %vm264, %v512, %v511
          %v514 = vsel %vm266, %v512, %v513
          %515 = vrot.lane.b32.xlu0 %v514, 89
          %v516 = vpop.permute.xlu0 %515
          %vm518 = vcmask 855752
          %519 = vst.msk [vmem:[#allocation2 + $0x4] sm:$0xf] %vm518, %v516
          %v520 = vld [vmem:[%s198 + $0xc] sm:$0x1]
          %v521 = vld [vmem:[%s198 + $0x1c] sm:$0x1]
          %v522 = vld [vmem:[%s198 + $0x2c] sm:$0x1]
          %v523 = vld [vmem:[%s198 + $0x3c] sm:$0x1]
          %v528 = vrot.slane %v521, 7
          %v529 = vsel %vm254, %v528, %v520
          %v530 = vsel %vm256, %v528, %v529
          %v531 = vrot.slane %v522, 6
          %v532 = vsel %vm259, %v531, %v530
          %v533 = vsel %vm261, %v531, %v532
          %v534 = vrot.slane %v523, 5
          %v535 = vsel %vm264, %v534, %v533
          %v536 = vsel %vm266, %v534, %v535
          %537 = vrot.lane.b32.xlu0 %v536, 107
          %v538 = vpop.permute.xlu0 %537
          %vm540 = vcmask 1003352
          %541 = vst.msk [vmem:[#allocation2 + $0x4] sm:$0xf] %vm540, %v538
          %v542 = vld [vmem:[%s198 + $0xd] sm:$0x1]
          %v543 = vld [vmem:[%s198 + $0x1d] sm:$0x1]
          %v544 = vld [vmem:[%s198 + $0x2d] sm:$0x1]
          %v545 = vld [vmem:[%s198 + $0x3d] sm:$0x1]
          %v550 = vrot.slane %v543, 7
          %v551 = vsel %vm254, %v550, %v542
          %v552 = vsel %vm256, %v550, %v551
          %v553 = vrot.slane %v544, 6
          %v554 = vsel %vm259, %v553, %v552
          %v555 = vsel %vm261, %v553, %v554
          %v556 = vrot.slane %v545, 5
          %v557 = vsel %vm264, %v556, %v555
          %v558 = vsel %vm266, %v556, %v557
          %559 = vrot.lane.b32.xlu0 %v558, 125
          %v560 = vpop.permute.xlu0 %559
          %v561 = vrot.slane %v560, 4
          %vm562 = vcmask 1022976
          %v563 = vsel %vm562, %v561, %v560
          %vm565 = vcmask 1044456
          %vm566 = vcmask 105476
          %vm567 = vmor %vm566, %vm565
          %568 = vst.msk [vmem:[#allocation2 + $0x4] sm:$0xff] %vm567, %v563
          %v569 = vld [vmem:[%s198 + $0xe] sm:$0x1]
          %v570 = vld [vmem:[%s198 + $0x1e] sm:$0x1]
          %v571 = vld [vmem:[%s198 + $0x2e] sm:$0x1]
          %v572 = vld [vmem:[%s198 + $0x3e] sm:$0x1]
          %v577 = vrot.slane %v570, 7
          %v578 = vsel %vm254, %v577, %v569
          %v579 = vsel %vm256, %v577, %v578
          %v580 = vrot.slane %v571, 6
          %v581 = vsel %vm259, %v580, %v579
          %v582 = vsel %vm261, %v580, %v581
          %v583 = vrot.slane %v572, 5
          %v584 = vsel %vm264, %v583, %v582
          %v585 = vsel %vm266, %v583, %v584
          %586 = vrot.lane.b32.xlu0 %v585, 15
          %v587 = vpop.permute.xlu0 %586
          %vm589 = vcmask 248952
          %590 = vst.msk [vmem:[#allocation2 + $0x8] sm:$0xf] %vm589, %v587
          %v591 = vld [vmem:[%s198 + $0xf] sm:$0x1]
          %v592 = vld [vmem:[%s198 + $0x1f] sm:$0x1]
          %v593 = vld [vmem:[%s198 + $0x2f] sm:$0x1]
          %v594 = vld [vmem:[%s198 + $0x3f] sm:$0x1]
          %v599 = vrot.slane %v592, 7
          %v600 = vsel %vm254, %v599, %v591
          %v601 = vsel %vm256, %v599, %v600
          %v602 = vrot.slane %v593, 6
          %v603 = vsel %vm259, %v602, %v601
          %v604 = vsel %vm261, %v602, %v603
          %v605 = vrot.slane %v594, 5
          %v606 = vsel %vm264, %v605, %v604
          %v607 = vsel %vm266, %v605, %v606
          %608 = vrot.lane.b32.xlu0 %v607, 33
          %v609 = vpop.permute.xlu0 %608
          %vm611 = vcmask 396552
          %612 = vst.msk [vmem:[#allocation2 + $0x8] sm:$0xf] %vm611, %v609
          %613 = vst [vmem:[#allocation3] sm:$0xff] 0.0
          %614 = vst [vmem:[#allocation3 + $0x8] sm:$0xff] 0.0
          %vm615 = vcmask 261120
          %616 = vst.msk [vmem:[#allocation3 + $0x10] sm:$0xff] %vm615, 0.0
          %617 = vst [vmem:[#allocation3 + $0x18] sm:$0xff] 0.0
          %618 = vst [vmem:[#allocation3 + $0x20] sm:$0xff] 0.0
          %619 = vst.msk [vmem:[#allocation3 + $0x28] sm:$0xff] %vm615, 0.0
          %620 = vst [vmem:[#allocation3 + $0x30] sm:$0xff] 0.0
          %621 = vst [vmem:[#allocation3 + $0x38] sm:$0xff] 0.0
          %622 = vst.msk [vmem:[#allocation3 + $0x40] sm:$0xff] %vm615, 0.0
          %623 = vst [vmem:[#allocation3 + $0x48] sm:$0xff] 0.0
          %624 = vst [vmem:[#allocation3 + $0x50] sm:$0xff] 0.0
          %625 = vst.msk [vmem:[#allocation3 + $0x58] sm:$0xff] %vm615, 0.0
          %626 = vst [vmem:[#allocation3 + $0x60] sm:$0xff] 0.0
          %627 = vst [vmem:[#allocation3 + $0x68] sm:$0xff] 0.0
          %628 = vst.msk [vmem:[#allocation3 + $0x70] sm:$0xff] %vm615, 0.0
          %629 = vst [vmem:[#allocation3 + $0x78] sm:$0xff] 0.0
          %630 = vst [vmem:[#allocation3 + $0x80] sm:$0xff] 0.0
          %631 = vst.msk [vmem:[#allocation3 + $0x88] sm:$0xff] %vm615, 0.0
          %632 = vst [vmem:[#allocation3 + $0x90] sm:$0xff] 0.0
          %633 = vst [vmem:[#allocation3 + $0x98] sm:$0xff] 0.0
          %634 = vst.msk [vmem:[#allocation3 + $0xa0] sm:$0xff] %vm615, 0.0
          %635 = vst [vmem:[#allocation3 + $0xa8] sm:$0xff] 0.0
          %636 = vst [vmem:[#allocation3 + $0xb0] sm:$0xff] 0.0
          %637 = vst.msk [vmem:[#allocation3 + $0xb8] sm:$0xff] %vm615, 0.0
          %638 = vst [vmem:[#allocation3 + $0xc0] sm:$0xff] 0.0
          %639 = vst [vmem:[#allocation3 + $0xc8] sm:$0xff] 0.0
          %640 = vst.msk [vmem:[#allocation3 + $0xd0] sm:$0xff] %vm615, 0.0
          %v641 = vld [vmem:[#allocation2] sm:$0xff]
          %v642 = vld [vmem:[#allocation2 + $0x8] sm:$0xf]
          %v644 = vcombine.high %v641, %v641
          %646 = vst [vmem:[#allocation3] sm:$0xf] %v641
          %647 = vst [vmem:[#allocation3 + $0x8] sm:$0xf] %v644
          %vm648 = vcmask 257024
          %649 = vst.msk [vmem:[#allocation3 + $0x10] sm:$0xf] %vm648, %v642
          %v650 = vld [vmem:[#allocation2] sm:$0xff]
          %v651 = vld [vmem:[#allocation2 + $0x8] sm:$0xf]
          %v654 = vcombine.high %v650, %v650
          %655 = vrot.lane.b32.xlu0 %v650, 127
          %v656 = vpop.permute.xlu0 %655
          %657 = vrot.lane.b32.xlu0 %v654, 127
          %v658 = vpop.permute.xlu0 %657
          %659 = vrot.lane.b32.xlu0 %v651, 127
          %v660 = vpop.permute.xlu0 %659
          %v661 = vsel %vm403, %v656, %v658
          %v662 = vsel %vm403, %v658, %v660
          %666 = vst [vmem:[#allocation3 + $0x18] sm:$0xf] %v661
          %667 = vst [vmem:[#allocation3 + $0x20] sm:$0xf] %v662
          %668 = vst.msk [vmem:[#allocation3 + $0x28] sm:$0xf] %vm648, %v660
          %v669 = vld [vmem:[#allocation2] sm:$0xff]
          %v670 = vld [vmem:[#allocation2 + $0x8] sm:$0xf]
          %v673 = vcombine.high %v669, %v669
          %674 = vrot.lane.b32.xlu0 %v669, 126
          %v675 = vpop.permute.xlu0 %674
          %676 = vrot.lane.b32.xlu0 %v673, 126
          %v677 = vpop.permute.xlu0 %676
          %678 = vrot.lane.b32.xlu0 %v670, 126
          %v679 = vpop.permute.xlu0 %678
          %vm680 = vcmask 1031168
          %v681 = vsel %vm680, %v675, %v677
          %v682 = vsel %vm680, %v677, %v679
          %686 = vst [vmem:[#allocation3 + $0x30] sm:$0xf] %v681
          %687 = vst [vmem:[#allocation3 + $0x38] sm:$0xf] %v682
          %688 = vst.msk [vmem:[#allocation3 + $0x40] sm:$0xf] %vm648, %v679
          %v689 = vld [vmem:[#allocation2] sm:$0xff]
          %v690 = vld [vmem:[#allocation2 + $0x8] sm:$0xf]
          %v693 = vcombine.high %v689, %v689
          %694 = vrot.lane.b32.xlu0 %v689, 110
          %v695 = vpop.permute.xlu0 %694
          %696 = vrot.lane.b32.xlu0 %v693, 110
          %v697 = vpop.permute.xlu0 %696
          %698 = vrot.lane.b32.xlu0 %v690, 110
          %v699 = vpop.permute.xlu0 %698
          %vm700 = vcmask 900096
          %v701 = vsel %vm700, %v695, %v697
          %v702 = vsel %vm700, %v697, %v699
          %706 = vst [vmem:[#allocation3 + $0x48] sm:$0xf] %v701
          %707 = vst [vmem:[#allocation3 + $0x50] sm:$0xf] %v702
          %708 = vst.msk [vmem:[#allocation3 + $0x58] sm:$0xf] %vm648, %v699
          %v709 = vld [vmem:[#allocation2] sm:$0xff]
          %v710 = vld [vmem:[#allocation2 + $0x8] sm:$0xf]
          %v713 = vcombine.high %v709, %v709
          %714 = vrot.lane.b32.xlu0 %v709, 109
          %v715 = vpop.permute.xlu0 %714
          %716 = vrot.lane.b32.xlu0 %v713, 109
          %v717 = vpop.permute.xlu0 %716
          %718 = vrot.lane.b32.xlu0 %v710, 109
          %v719 = vpop.permute.xlu0 %718
          %vm720 = vcmask 891904
          %v721 = vsel %vm720, %v715, %v717
          %v722 = vsel %vm720, %v717, %v719
          %726 = vst [vmem:[#allocation3 + $0x60] sm:$0xf] %v721
          %727 = vst [vmem:[#allocation3 + $0x68] sm:$0xf] %v722
          %728 = vst.msk [vmem:[#allocation3 + $0x70] sm:$0xf] %vm648, %v719
          %v729 = vld [vmem:[#allocation2] sm:$0xff]
          %v730 = vld [vmem:[#allocation2 + $0x8] sm:$0xf]
          %v733 = vcombine.high %v729, %v729
          %734 = vrot.lane.b32.xlu0 %v729, 108
          %v735 = vpop.permute.xlu0 %734
          %736 = vrot.lane.b32.xlu0 %v733, 108
          %v737 = vpop.permute.xlu0 %736
          %738 = vrot.lane.b32.xlu0 %v730, 108
          %v739 = vpop.permute.xlu0 %738
          %vm740 = vcmask 883712
          %v741 = vsel %vm740, %v735, %v737
          %v742 = vsel %vm740, %v737, %v739
          %746 = vst [vmem:[#allocation3 + $0x78] sm:$0xf] %v741
          %747 = vst [vmem:[#allocation3 + $0x80] sm:$0xf] %v742
          %748 = vst.msk [vmem:[#allocation3 + $0x88] sm:$0xf] %vm648, %v739
          %v749 = vld [vmem:[#allocation2] sm:$0xff]
          %v750 = vld [vmem:[#allocation2 + $0x8] sm:$0xf]
          %v753 = vcombine.high %v749, %v749
          %754 = vrot.lane.b32.xlu0 %v749, 92
          %v755 = vpop.permute.xlu0 %754
          %756 = vrot.lane.b32.xlu0 %v753, 92
          %v757 = vpop.permute.xlu0 %756
          %758 = vrot.lane.b32.xlu0 %v750, 92
          %v759 = vpop.permute.xlu0 %758
          %vm760 = vcmask 752640
          %v761 = vsel %vm760, %v755, %v757
          %v762 = vsel %vm760, %v757, %v759
          %766 = vst [vmem:[#allocation3 + $0x90] sm:$0xf] %v761
          %767 = vst [vmem:[#allocation3 + $0x98] sm:$0xf] %v762
          %768 = vst.msk [vmem:[#allocation3 + $0xa0] sm:$0xf] %vm648, %v759
          %v769 = vld [vmem:[#allocation2] sm:$0xff]
          %v770 = vld [vmem:[#allocation2 + $0x8] sm:$0xf]
          %v773 = vcombine.high %v769, %v769
          %774 = vrot.lane.b32.xlu0 %v769, 91
          %v775 = vpop.permute.xlu0 %774
          %776 = vrot.lane.b32.xlu0 %v773, 91
          %v777 = vpop.permute.xlu0 %776
          %778 = vrot.lane.b32.xlu0 %v770, 91
          %v779 = vpop.permute.xlu0 %778
          %vm780 = vcmask 744448
          %v781 = vsel %vm780, %v775, %v777
          %v782 = vsel %vm780, %v777, %v779
          %786 = vst [vmem:[#allocation3 + $0xa8] sm:$0xf] %v781
          %787 = vst [vmem:[#allocation3 + $0xb0] sm:$0xf] %v782
          %788 = vst.msk [vmem:[#allocation3 + $0xb8] sm:$0xf] %vm648, %v779
          %v789 = vld [vmem:[#allocation2] sm:$0xff]
          %v790 = vld [vmem:[#allocation2 + $0x8] sm:$0xf]
          %v793 = vcombine.high %v789, %v789
          %794 = vrot.lane.b32.xlu0 %v789, 90
          %v795 = vpop.permute.xlu0 %794
          %796 = vrot.lane.b32.xlu0 %v793, 90
          %v797 = vpop.permute.xlu0 %796
          %798 = vrot.lane.b32.xlu0 %v790, 90
          %v799 = vpop.permute.xlu0 %798
          %vm800 = vcmask 736256
          %v801 = vsel %vm800, %v795, %v797
          %v802 = vsel %vm800, %v797, %v799
          %806 = vst [vmem:[#allocation3 + $0xc0] sm:$0xf] %v801
          %807 = vst [vmem:[#allocation3 + $0xc8] sm:$0xf] %v802
          %808 = vst.msk [vmem:[#allocation3 + $0xd0] sm:$0xf] %vm648, %v799
        $region40: #{tpu_custom_call.1} parent=31 // pred_fallthru
          _
        %v809 = vld [vmem:[%s232] sm:$0xf]
        %v810 = vld [vmem:[#allocation3] sm:$0xff]
        %v811 = vld [vmem:[#allocation3 + $0x8] sm:$0xff]
        %v812 = vld [vmem:[#allocation3 + $0x10] sm:$0xff]
        %v813 = vld [vmem:[#allocation3 + $0x18] sm:$0xff]
        %v814 = vld [vmem:[#allocation3 + $0x20] sm:$0xff]
        %v815 = vld [vmem:[#allocation3 + $0x28] sm:$0xff]
        %v816 = vld [vmem:[#allocation3 + $0x30] sm:$0xff]
        %v817 = vld [vmem:[#allocation3 + $0x38] sm:$0xff]
        %v818 = vld [vmem:[#allocation3 + $0x40] sm:$0xff]
        %v819 = vld [vmem:[#allocation3 + $0x48] sm:$0xff]
        %v820 = vld [vmem:[#allocation3 + $0x50] sm:$0xff]
        %v821 = vld [vmem:[#allocation3 + $0x58] sm:$0xff]
        %v822 = vld [vmem:[#allocation3 + $0x60] sm:$0xff]
        %v823 = vld [vmem:[#allocation3 + $0x68] sm:$0xff]
        %v824 = vld [vmem:[#allocation3 + $0x70] sm:$0xff]
        %v825 = vld [vmem:[#allocation3 + $0x78] sm:$0xff]
        %v826 = vld [vmem:[#allocation3 + $0x80] sm:$0xff]
        %v827 = vld [vmem:[#allocation3 + $0x88] sm:$0xff]
        %v828 = vld [vmem:[#allocation3 + $0x90] sm:$0xff]
        %v829 = vld [vmem:[#allocation3 + $0x98] sm:$0xff]
        %v830 = vld [vmem:[#allocation3 + $0xa0] sm:$0xff]
        %v831 = vld [vmem:[#allocation3 + $0xa8] sm:$0xff]
        %v832 = vld [vmem:[#allocation3 + $0xb0] sm:$0xff]
        %v833 = vld [vmem:[#allocation3 + $0xb8] sm:$0xff]
        %v834 = vld [vmem:[#allocation3 + $0xc0] sm:$0xff]
        %v835 = vld [vmem:[#allocation3 + $0xc8] sm:$0xff]
        %v836 = vld [vmem:[#allocation3 + $0xd0] sm:$0xff]
        %v837 = vpack.c.bf16 %v813, %v810
        %v838 = vpack.c.bf16 %v814, %v811
        %v839 = vpack.c.bf16 %v815, %v812
        %v840 = vpack.c.bf16 %v819, %v816
        %v841 = vpack.c.bf16 %v820, %v817
        %v842 = vpack.c.bf16 %v821, %v818
        %v843 = vpack.c.bf16 %v825, %v822
        %v844 = vpack.c.bf16 %v826, %v823
        %v845 = vpack.c.bf16 %v827, %v824
        %v846 = vpack.c.bf16 %v831, %v828
        %v847 = vpack.c.bf16 %v832, %v829
        %v848 = vpack.c.bf16 %v833, %v830
        %v849 = vpack.c.bf16 %v834, %v834
        %v850 = vpack.c.bf16 %v835, %v835
        %v851 = vpack.c.bf16 %v836, %v836
        %v852 = vld [vmem:[%s236] sm:$0xff]
        %854 = vset.pattern.permute.xlu0 0
        %855 = vperm.xlu0 %854, %v852
        %v856 = vpop.permute.xlu0 %855
        %vm858 = vcmask 588800
        %v860 = vsel %vm858, %v809, 0
        %vm862 = vcmask 1043456
        %v864 = vsel %vm862, %v849, 0
        %v867 = vsel %vm862, %v850, 0
        %v870 = vsel %vm862, %v851, 0
        %872 = vmatprep.subr.bf16.mxu0 %v838
        %873 = vmatpush1.bf16.msra.mxu0 %v837
        %874 = vmatprep.subr.bf16.mxu0 %v841
        %875 = vmatpush1.bf16.msra.mxu0 %v840
        %876 = vmatprep.subr.bf16.mxu0 %v844
        %877 = vmatpush1.bf16.msra.mxu0 %v843
        %878 = vmatprep.subr.bf16.mxu0 %v847
        %879 = vmatpush1.bf16.msra.mxu0 %v846
        %880 = vmatprep.subr.bf16.mxu0 %v867
        %881 = vmatpush1.bf16.msra.mxu0 %v864
        %882 = vmatprep.subr.bf16.mxu0 0
        %883 = vmatpush1.bf16.msra.mxu0 0
        %884 = vmatprep.subr.bf16.mxu0 0
        %885 = vmatpush1.bf16.msra.mxu0 0
        %886 = vmatprep.subr.bf16.mxu0 0
        %887 = vmatpush1.bf16.msra.mxu0 0
        %888 = vmatprep.subr.bf16.mxu0 0
        %889 = vmatpush1.bf16.msra.mxu0 0
        %890 = vmatprep.subr.bf16.mxu0 0
        %891 = vmatpush1.bf16.msra.mxu0 0
        %892 = vmatprep.subr.bf16.mxu0 0
        %893 = vmatpush1.bf16.msra.mxu0 0
        %894 = vmatprep.subr.bf16.mxu0 0
        %895 = vmatpush1.bf16.msra.mxu0 0
        %896 = vmatprep.subr.bf16.mxu0 0
        %897 = vmatpush1.bf16.msra.mxu0 0
        %898 = vmatprep.subr.bf16.mxu0 0
        %899 = vmatpush1.bf16.msra.mxu0 0
        %900 = vmatprep.subr.bf16.mxu0 0
        %901 = vmatpush1.bf16.msra.mxu0 0
        %902 = vmatprep.subr.bf16.mxu0 0
        %903 = vmatpush1.bf16.msra.mxu0 0
        %904 = vmatprep.mubr.bf16.mxu0 0
        %905 = vmatmul.mubr.bf16.gmra.mrb[0].mxu0 %v860
        %v906 = vpop.f32.mrb[0].mxu0
        %v907 = vadd.f32 %v856, %v906
        %v908 = vpop.f32.mrb[0].mxu0
        %v909 = vadd.f32 %v856, %v908
        %v910 = vpop.f32.mrb[0].mxu0
        %v911 = vpop.f32.mrb[0].mxu0
        %912 = vdwg.mxu0
        %913 = vmatprep.subr.bf16.mxu0 0
        %914 = vmatpush1.bf16.msra.mxu0 %v839
        %915 = vmatprep.subr.bf16.mxu0 0
        %916 = vmatpush1.bf16.msra.mxu0 %v842
        %917 = vmatprep.subr.bf16.mxu0 0
        %918 = vmatpush1.bf16.msra.mxu0 %v845
        %919 = vmatprep.subr.bf16.mxu0 0
        %920 = vmatpush1.bf16.msra.mxu0 %v848
        %921 = vmatprep.subr.bf16.mxu0 0
        %922 = vmatpush1.bf16.msra.mxu0 %v870
        %923 = vmatprep.subr.bf16.mxu0 0
        %924 = vmatpush1.bf16.msra.mxu0 0
        %925 = vmatprep.subr.bf16.mxu0 0
        %926 = vmatpush1.bf16.msra.mxu0 0
        %927 = vmatprep.subr.bf16.mxu0 0
        %928 = vmatpush1.bf16.msra.mxu0 0
        %929 = vmatprep.subr.bf16.mxu0 0
        %930 = vmatpush1.bf16.msra.mxu0 0
        %931 = vmatprep.subr.bf16.mxu0 0
        %932 = vmatpush1.bf16.msra.mxu0 0
        %933 = vmatprep.subr.bf16.mxu0 0
        %934 = vmatpush1.bf16.msra.mxu0 0
        %935 = vmatprep.subr.bf16.mxu0 0
        %936 = vmatpush1.bf16.msra.mxu0 0
        %937 = vmatprep.subr.bf16.mxu0 0
        %938 = vmatpush1.bf16.msra.mxu0 0
        %939 = vmatprep.subr.bf16.mxu0 0
        %940 = vmatpush1.bf16.msra.mxu0 0
        %941 = vmatprep.subr.bf16.mxu0 0
        %942 = vmatpush1.bf16.msra.mxu0 0
        %943 = vmatprep.subr.bf16.mxu0 0
        %944 = vmatpush1.bf16.msra.mxu0 0
        %945 = vmatprep.mubr.bf16.mxu0 0
        %946 = vmatmul.mubr.bf16.gmra.mrb[0].mxu0 %v860
        %v947 = vpop.f32.mrb[0].mxu0
        %v948 = vadd.f32 %v856, %v947
        %v949 = vpop.f32.mrb[0].mxu0
        %v950 = vpop.f32.mrb[0].mxu0
        %v951 = vpop.f32.mrb[0].mxu0
        %952 = vdwg.mxu0
        %953 = vst [vmem:[%s228] sm:$0xff] %v907
        %954 = vst [vmem:[%s228 + $0x8] sm:$0xff] %v909
        %vm955 = vcmask 261120
        %956 = vst.msk [vmem:[%s228 + $0x10] sm:$0xff] %vm955, %v948
        %s957 = sand.u32 %s120, 1
        %s958 = scalar_lea.sflag [#allocation6], %s957
        %s959 = sand.u32 %s120, 1
        %s960 = smul.addr %s959, 24
        %s961 = scalar_lea.vmem [#allocation7], %s960
        // Predicated region
        $region41: #{tpu_custom_call.1} parent=31 // pred_check
          %p962 = pneg %p130
        $region42: #{tpu_custom_call.1} parent=31 // pred_check_branch
          %964 = sbr.rel (%p962) target = $region44
        $region43: #{tpu_custom_call.1} parent=31 // pred_region
          %s966 = ssub.s32 384, 384
          %967 = vsyncadd %s958, %s966
          %s968 = smul.addr %s25, 3
          %s969 = smul.addr %s24, 12
          %s970 = sadd.s32 %s968, %s969
          %s971 = smul.addr %s970, 128
          %s972 = scalar_lea.hbm %s3, %s971
          %s974 = sshll.u32 %s961, 4
          %s975 = int_to_ptr.vmem [resolvable:$true] %s974
          %977 = dma.vmem_to_hbm [thread:$0]  %s975, 384, %s972, %s958
        $region44: #{tpu_custom_call.1} parent=31 // pred_fallthru
          _
      $region32: #{tpu_custom_call.1} parent=5 // pred_fallthru
        _
      %p978 = scmp.le.s32.totalorder 2, %s15
      // Predicated region
      $region45: #{tpu_custom_call.1} parent=5 // pred_check
        %p979 = pneg %p978
      $region46: #{tpu_custom_call.1} parent=5 // pred_check_branch
        %981 = sbr.rel (%p979) target = $region48
      $region47: #{tpu_custom_call.1} parent=5 // pred_region
        %s982 = ssub.s32 %s15, 2
        // Predicated region
        $region49: #{tpu_custom_call.1} parent=47 // pred_check
          %p983 = pneg %p136
        $region50: #{tpu_custom_call.1} parent=47 // pred_check_branch
          %985 = sbr.rel (%p983) target = $region52
        $region51: #{tpu_custom_call.1} parent=47 // pred_region
          %s986 = sand.u32 %s121, 1
          %s987 = scalar_lea.sflag [#allocation6], %s986
          %s988 = sand.u32 %s121, 1
          %s989 = smul.addr %s988, 24
          %s990 = scalar_lea.vmem [#allocation7], %s989
          %991 = dma.done %s987, 384
        $region52: #{tpu_custom_call.1} parent=47 // pred_fallthru
          _
      $region48: #{tpu_custom_call.1} parent=5 // pred_fallthru
        _
    $region6: #{tpu_custom_call.1} parent=1 // loop_footer
      %s19 = sadd.s32 1, %s15
    $region7: #{tpu_custom_call.1} parent=1 // loop_footer_branch
      %14 = sbr.rel target = $region3
    $region8: #{tpu_custom_call.1} parent=1 // loop_exit
      _
    %992 = vsyncpa [#allocation5], 1
    %s993 = scalar_lea.sflag [#allocation5], 1
    %994 = vsyncpa %s993, 1
    %995 = vsyncpa [#allocation6], 1
    %s996 = scalar_lea.sflag [#allocation6], 1
    %997 = vsyncpa %s996, 1

</llo_original>
